<compile_context>
chip_gen: v7x
topology: tpu7x:2x2x1
jax: 0.10.0
libtpu: 0.0.40
codegen_flags: <defaults>
</compile_context>

<pallas_src>
import functools

import jax
import jax.numpy as jnp
from jax.experimental import pallas as pl
from jax.experimental.pallas import tpu as pltpu


def _cosine_gate_kernel(x_ref, w_ref, b_ref, sim_ref, out_ref):
    # x tile: [TN, D] (compute dtype), W: [D, P] (compute dtype),
    # b: [1, P] f32, sim_scaled: [P, E_pad] f32.
    proj = jnp.dot(x_ref[...], w_ref[...],
                   preferred_element_type=jnp.float32) + b_ref[...]   # [TN, P] f32

    # Cosine logits before row normalization (lane-dense [TN, E_pad]).
    logits = jnp.dot(proj, sim_ref[...],
                     preferred_element_type=jnp.float32)              # [TN, E_pad]

    # F.normalize(proj, dim=1, eps=1e-12) == scale rows by
    # rsqrt(max(sum(row^2), 1e-24)); rsqrt runs on the EUP slot.
    sumsq = jnp.sum(proj * proj, axis=-1, keepdims=True)              # [TN, 1]
    inv_norm = jax.lax.rsqrt(jnp.maximum(sumsq, 1e-24))

    out_ref[...] = (logits * inv_norm).astype(out_ref.dtype)


def _round_up(v, m):
    return (v + m - 1) // m * m


def _cdiv(a, b):
    return (a + b - 1) // b


def _physical_vmem_bytes():
    try:
        return int(pltpu.get_tpu_info().vmem_capacity_bytes)
    except Exception:
        return 64 * 1024 * 1024   # conservative (v7x per-core VMEM)


def _resident_spec(block_shape, index_map):
    # Constant index map => block never changes; one buffer is enough.
    try:
        return pl.BlockSpec(block_shape, index_map, pipeline_mode=pl.Buffered(1))
    except Exception:   # older jax without pipeline_mode / Buffered
        return pl.BlockSpec(block_shape, index_map)


@functools.partial(jax.jit, static_argnames=("tn", "compute_dtype"))
def cosine_topk_gate(x, w, b, sim_matrix, temperature, *, tn=1024,
                     compute_dtype=jnp.bfloat16):
    """x: [N, model_dim], w: [model_dim, proj_dim] (pre-transposed Linear
    weight), b: [proj_dim], sim_matrix: [proj_dim, num_experts],
    temperature: scalar. Returns logits [N, num_experts] (float32)."""
    n, d = x.shape
    p, e = sim_matrix.shape
    assert w.shape == (d, p)

    # --- hoisted token-independent prep (tiny [P, E] op) --------------------
    scale = jnp.exp(jnp.minimum(temperature.reshape(()).astype(jnp.float32),
                                jnp.log(1.0 / 0.01)))
    sim32 = sim_matrix.astype(jnp.float32)
    col_norm = jnp.sqrt(jnp.sum(sim32 * sim32, axis=0, keepdims=True))
    sim_scaled = sim32 / jnp.maximum(col_norm, 1e-12) * scale          # [P, E]

    # Lane-dense expert dim: pad to a multiple of 128, slice outside kernel.
    e_pad = max(128, _round_up(e, 128))
    if e_pad != e:
        sim_scaled = jnp.pad(sim_scaled, ((0, 0), (0, e_pad - e)))

    b2 = b.reshape(1, p).astype(jnp.float32)

    # bf16 streamed activation + resident weight (MXU-native, f32 accumulate).
    x_c = x.astype(compute_dtype)
    w_c = w.astype(compute_dtype)
    in_bytes = jnp.dtype(compute_dtype).itemsize

    # --- chip-aware VMEM budget & token tile size ---------------------------
    phys_vmem = _physical_vmem_bytes()
    budget = int(phys_vmem * 0.8)

    def est(tn_):
        return (2 * tn_ * d * in_bytes       # double-buffered x tiles
                + 2 * tn_ * e_pad * 4        # double-buffered out tiles
                + d * p * in_bytes           # resident W (single buffer)
                + p * 4 + p * e_pad * 4      # resident bias + sim_scaled
                + 2 * tn_ * p * 4)           # f32 proj intermediate + slack

    if n <= 128:
        tn = n                                      # single grid step for tiny problems
    else:
        tn = max(128, min(_round_up(tn, 128), _round_up(n, 128)))
        if n >= 256:
            # >=2 grid steps so the "parallel" axis shards over 2 TCs (v7x).
            tn = min(tn, _round_up(_cdiv(n, 2), 128))
        while tn > 128 and est(tn) > budget:
            tn = max(128, _round_up(tn // 2, 128))

    if est(tn) > budget:
        # TODO(synk): for very large model_dim on 64 MiB-VMEM parts, add a second
        # "arbitrary" grid axis over D with a [tn, p] f32 accumulator instead of
        # shrinking tn further.
        raise ValueError(
            f"cosine_topk_gate: VMEM estimate {est(tn)} B exceeds budget "
            f"{budget} B (physical {phys_vmem} B); needs D-axis tiling.")

    vmem_limit = int(min(budget, max(2 * est(tn), 16 * 1024 * 1024)))
    grid = (_cdiv(n, tn),)

    cost = pl.CostEstimate(
        flops=2 * n * d * p + 2 * n * p * e_pad,
        transcendentals=n,
        bytes_accessed=(n * d * in_bytes + d * p * in_bytes + p * 4
                        + p * e_pad * 4 + n * e_pad * 4))

    out_pad = pl.pallas_call(
        _cosine_gate_kernel,
        out_shape=jax.ShapeDtypeStruct((n, e_pad), jnp.float32),
        grid=grid,
        in_specs=[
            pl.BlockSpec((tn, d), lambda i: (i, 0)),        # x: streamed per tile
            _resident_spec((d, p), lambda i: (0, 0)),        # W: resident, 1 buffer
            _resident_spec((1, p), lambda i: (0, 0)),        # bias: resident
            _resident_spec((p, e_pad), lambda i: (0, 0)),    # sim_scaled: resident
        ],
        out_specs=pl.BlockSpec((tn, e_pad), lambda i: (i, 0)),
        compiler_params=pltpu.CompilerParams(
            dimension_semantics=("parallel",),               # token tiles independent
            vmem_limit_bytes=vmem_limit,
        ),
        cost_estimate=cost,
    )(x_c, w_c, b2, sim_scaled)

    return out_pad[:, :e] if e_pad != e else out_pad


if __name__ == "__main__":
    # Module config (CosineTopKGate defaults at small scale)
    model_dim = 32
    proj_dim = 256
    num_global_experts = 8
    init_t = 0.5
    n_tokens = 256          # small, but still exercises the token grid (2 tiles)

    key = jax.random.PRNGKey(0)
    kx, kw, kb, ks = jax.random.split(key, 4)

    x = jax.random.normal(kx, (n_tokens, model_dim), dtype=jnp.float32)
    # cosine_projector: Linear(model_dim, proj_dim); weight stored pre-transposed
    w = jax.random.normal(kw, (model_dim, proj_dim), dtype=jnp.float32) * 0.02
    b = jax.random.normal(kb, (proj_dim,), dtype=jnp.float32) * 0.02
    # sim_matrix ~ normal(0, 0.01), shape [proj_dim, num_global_experts]
    sim_matrix = jax.random.normal(
        ks, (proj_dim, num_global_experts), dtype=jnp.float32) * 0.01
    # temperature = log(1 / init_t)
    temperature = jnp.log(jnp.full((1,), 1.0 / init_t, dtype=jnp.float32))

    logits = cosine_topk_gate(x, w, b, sim_matrix, temperature)
    logits = jax.block_until_ready(logits)

    # Pure-JAX reference (mirrors the PyTorch forward)
    def ref_forward(x_in, w_in):
        proj = x_in @ w_in + b
        proj_n = proj / jnp.maximum(
            jnp.linalg.norm(proj, axis=1, keepdims=True), 1e-12)
        sim_n = sim_matrix / jnp.maximum(
            jnp.linalg.norm(sim_matrix, axis=0, keepdims=True), 1e-12)
        scl = jnp.exp(jnp.minimum(temperature[0], jnp.log(1.0 / 0.01)))
        return proj_n @ sim_n * scl

    # Matched-precision reference (inputs through the same bf16 cast) — tight.
    ref_bf16 = ref_forward(x.astype(jnp.bfloat16).astype(jnp.float32),
                           w.astype(jnp.bfloat16).astype(jnp.float32))
    # Strict f32 module semantics — looser tolerance (bf16 input tradeoff).
    ref_f32 = ref_forward(x, w)

    assert logits.shape == (n_tokens, num_global_experts)
    assert jnp.allclose(logits, ref_bf16, atol=2e-3, rtol=2e-3), (
        float(jnp.max(jnp.abs(logits - ref_bf16))))
    assert jnp.allclose(logits, ref_f32, atol=3e-2, rtol=3e-2), (
        float(jnp.max(jnp.abs(logits - ref_f32))))

    print("KERNEL_OK")
</pallas_src>

<mosaic_0001>
module attributes {stable_mosaic.version = 11 : i64} {
  func.func @_cosine_gate_kernel(%arg0: i32, %arg1: memref<128x32xbf16, #tpu.memory_space<vmem>>, %arg2: memref<32x256xbf16, #tpu.memory_space<vmem>>, %arg3: memref<1x256xf32, #tpu.memory_space<vmem>>, %arg4: memref<256x128xf32, #tpu.memory_space<vmem>>, %arg5: memref<128x128xf32, #tpu.memory_space<vmem>>) attributes {dimension_semantics = [#tpu.dimension_semantics<parallel>], iteration_bounds = array<i64: 2>, scalar_prefetch = 0 : i64, scratch_operands = 0 : i64, tpu.core_type = #tpu.core_type<tc>, window_params = [{transform_indices = @transform_0, window_bounds = array<i64: 128, 32>}, {pipeline_mode = #tpu.pipeline_mode<synchronous>, transform_indices = @transform_1, window_bounds = array<i64: 32, 256>}, {pipeline_mode = #tpu.pipeline_mode<synchronous>, transform_indices = @transform_2, window_bounds = array<i64: 1, 256>}, {pipeline_mode = #tpu.pipeline_mode<synchronous>, transform_indices = @transform_3, window_bounds = array<i64: 256, 128>}, {transform_indices = @transform_4, window_bounds = array<i64: 128, 128>}]} {
    %c0 = arith.constant 0 : index
    %c0_0 = arith.constant 0 : index
    %0 = vector.load %arg1[%c0, %c0_0] : memref<128x32xbf16, #tpu.memory_space<vmem>>, vector<128x32xbf16>
    %c0_1 = arith.constant 0 : index
    %c0_2 = arith.constant 0 : index
    %1 = vector.load %arg2[%c0_1, %c0_2] : memref<32x256xbf16, #tpu.memory_space<vmem>>, vector<32x256xbf16>
    %cst = arith.constant dense<0.000000e+00> : vector<128x256xf32>
    %2 = tpu.matmul %0, %1, %cst {dimension_numbers = #tpu.dot_dimension_numbers<[1], [0], [0], [1], [0, 0, 1, 1], [], []>} : vector<128x32xbf16>, vector<32x256xbf16>, vector<128x256xf32> -> vector<128x256xf32>
    %c0_3 = arith.constant 0 : index
    %c0_4 = arith.constant 0 : index
    %3 = vector.load %arg3[%c0_3, %c0_4] : memref<1x256xf32, #tpu.memory_space<vmem>>, vector<1x256xf32>
    %4 = vector.broadcast %3 : vector<1x256xf32> to vector<128x256xf32>
    %5 = arith.addf %2, %4 : vector<128x256xf32>
    %c0_5 = arith.constant 0 : index
    %c0_6 = arith.constant 0 : index
    %6 = vector.load %arg4[%c0_5, %c0_6] : memref<256x128xf32, #tpu.memory_space<vmem>>, vector<256x128xf32>
    %cst_7 = arith.constant dense<0.000000e+00> : vector<128x128xf32>
    %7 = tpu.matmul %5, %6, %cst_7 {dimension_numbers = #tpu.dot_dimension_numbers<[1], [0], [0], [1], [0, 0, 1, 1], [], []>} : vector<128x256xf32>, vector<256x128xf32>, vector<128x128xf32> -> vector<128x128xf32>
    %8 = arith.mulf %5, %5 : vector<128x256xf32>
    %cst_8 = arith.constant dense<0.000000e+00> : vector<128xf32>
    %9 = vector.multi_reduction <add>, %8, %cst_8 [1] : vector<128x256xf32> to vector<128xf32>
    %10 = vector.shape_cast %9 : vector<128xf32> to vector<128x1xf32>
    %cst_9 = arith.constant 1.000000e-24 : f32
    %11 = vector.broadcast %cst_9 : f32 to vector<128x1xf32>
    %12 = arith.maximumf %10, %11 : vector<128x1xf32>
    %13 = math.rsqrt %12 : vector<128x1xf32>
    %14 = vector.broadcast %13 : vector<128x1xf32> to vector<128x128xf32>
    %15 = arith.mulf %7, %14 : vector<128x128xf32>
    %c0_10 = arith.constant 0 : index
    %c0_11 = arith.constant 0 : index
    %16 = vector.load %arg5[%c0_10, %c0_11] : memref<128x128xf32, #tpu.memory_space<vmem>>, vector<128x128xf32>
    tpu.vector_store %arg5[%c0_10, %c0_11], %15 {strides = array<i32>} : memref<128x128xf32, #tpu.memory_space<vmem>>, vector<128x128xf32>,
    return
  }
  func.func @transform_0(%arg0: i32) -> (i32, i32) {
    %c0_i32 = arith.constant 0 : i32
    %c0_i32_0 = arith.constant 0 : i32
    return %arg0, %c0_i32 : i32, i32
  }
  func.func @transform_1(%arg0: i32) -> (i32, i32) {
    %c0_i32 = arith.constant 0 : i32
    %c0_i32_0 = arith.constant 0 : i32
    %c0_i32_1 = arith.constant 0 : i32
    return %c0_i32, %c0_i32_0 : i32, i32
  }
  func.func @transform_2(%arg0: i32) -> (i32, i32) {
    %c0_i32 = arith.constant 0 : i32
    %c0_i32_0 = arith.constant 0 : i32
    %c0_i32_1 = arith.constant 0 : i32
    return %c0_i32, %c0_i32_0 : i32, i32
  }
  func.func @transform_3(%arg0: i32) -> (i32, i32) {
    %c0_i32 = arith.constant 0 : i32
    %c0_i32_0 = arith.constant 0 : i32
    %c0_i32_1 = arith.constant 0 : i32
    return %c0_i32, %c0_i32_0 : i32, i32
  }
  func.func @transform_4(%arg0: i32) -> (i32, i32) {
    %c0_i32 = arith.constant 0 : i32
    %c0_i32_0 = arith.constant 0 : i32
    return %arg0, %c0_i32 : i32, i32
  }
}

</mosaic_0001>

<llo_original>
// kernel: cosine_topk_gate.1
$region0: #{cosine_topk_gate.1}
  #allocation0 [shape = 'u32[]', space=smem, size = 0x4, offset = 0x4, fixed_abs, tag = 'smem constant byte address 0x4 - core index']
  #allocation1 [shape = 'u32[144,128]{1,0:T(1,128)}', space=vmem, size = 0x12000, scoped, tag = 'internal scratch']
  %s0 = inlined_call_operand.vmem [shape: bf16[256,32], index: 0, kind: input, shape index: {}]
  %s1 = inlined_call_operand.vmem [shape: bf16[32,256], index: 1, kind: input, shape index: {}]
  %s2 = inlined_call_operand.vmem [shape: f32[1,256], index: 2, kind: input, shape index: {}]
  %s3 = inlined_call_operand.vmem [shape: f32[256,128], index: 3, kind: input, shape index: {}]
  %s4 = inlined_call_operand.vmem [shape: f32[256,128], index: 4, kind: output, shape index: {}]
  %s5 = sld [smem:[#allocation0]]
  $region49: #{cosine_topk_gate.1} parent=0
    _
  %s7 = ssub.s32 1, %s5
  %s8 = scalar_select 0, %s7, %s5
  loop: start=0, step=1, limit=4
  $region2: #{cosine_topk_gate.1} parent=0 // loop_pre_header
    _
  $region3: #{cosine_topk_gate.1} parent=0 // loop_header
    %s10 = sphi 0, %s14
    %p11 = scmp.ge.s32.totalorder %s10, 4
    %s20 = sphi 0, %s22
    %s23 = sphi 0, %s20
    %s24 = sphi 0, %s23
    %s40 = sphi 0, %s24
    %s44 = sphi 0, %s44
    %s46 = sphi 0, %s44
    %s47 = sphi 0, %s46
    %s61 = sphi 0, %s47
    %s65 = sphi 0, %s65
    %s67 = sphi 0, %s65
    %s68 = sphi 0, %s67
    %s82 = sphi 0, %s68
    %s86 = sphi 0, %s86
    %s88 = sphi 0, %s86
    %s89 = sphi 0, %s88
    %s103 = sphi 0, %s89
    %s109 = sphi 0, %s111
    %s112 = sphi 0, %s109
    %s113 = sphi 0, %s112
    %s129 = sphi 0, %s113
  $region4: #{cosine_topk_gate.1} parent=0 // loop_header_branch
    %13 = sbr.rel (%p11) target = $region8
  $region5: #{cosine_topk_gate.1} parent=0 // loop_body
    %s15 = ssub.s32 %s10, 1
    %s16 = ssub.s32 %s10, 2
    %s17 = sadd.s32 %s10, 1
    %s18 = ssub.s32 %s10, %s17
    %p19 = scmp.eq.s32.totalorder %s18, 0
    %s21 = sadd.s32 %s20, 1
    %s22 = scalar_select %p19, %s20, %s21
    %p25 = pneg %p19
    %p26 = scmp.eq.s32.totalorder %s10, 1
    %p27 = por %p25, %p26
    %p28 = scmp.ne.s32.totalorder %s20, %s23
    %p29 = scmp.eq.s32.totalorder %s10, 0
    %p30 = por %p28, %p29
    %p31 = scmp.ne.s32.totalorder %s20, %s23
    %p32 = scmp.eq.s32.totalorder %s15, 1
    %p33 = por %p31, %p32
    %p34 = scmp.ne.s32.totalorder %s23, %s24
    %p35 = scmp.eq.s32.totalorder %s15, 0
    %p36 = por %p34, %p35
    %p37 = scmp.ne.s32.totalorder %s23, %s24
    %p38 = scmp.eq.s32.totalorder %s16, 1
    %p39 = por %p37, %p38
    %p41 = scmp.ne.s32.totalorder %s24, %s40
    %p42 = scmp.eq.s32.totalorder %s16, 0
    %p43 = por %p41, %p42
    %s45 = sadd.s32 %s44, 1
    %p48 = scmp.eq.s32.totalorder %s10, 1
    %p49 = scmp.ne.s32.totalorder %s44, %s46
    %p50 = scmp.eq.s32.totalorder %s10, 0
    %p51 = por %p49, %p50
    %p52 = scmp.ne.s32.totalorder %s44, %s46
    %p53 = scmp.eq.s32.totalorder %s15, 1
    %p54 = por %p52, %p53
    %p55 = scmp.ne.s32.totalorder %s46, %s47
    %p56 = scmp.eq.s32.totalorder %s15, 0
    %p57 = por %p55, %p56
    %p58 = scmp.ne.s32.totalorder %s46, %s47
    %p59 = scmp.eq.s32.totalorder %s16, 1
    %p60 = por %p58, %p59
    %p62 = scmp.ne.s32.totalorder %s47, %s61
    %p63 = scmp.eq.s32.totalorder %s16, 0
    %p64 = por %p62, %p63
    %s66 = sadd.s32 %s65, 1
    %p69 = scmp.eq.s32.totalorder %s10, 1
    %p70 = scmp.ne.s32.totalorder %s65, %s67
    %p71 = scmp.eq.s32.totalorder %s10, 0
    %p72 = por %p70, %p71
    %p73 = scmp.ne.s32.totalorder %s65, %s67
    %p74 = scmp.eq.s32.totalorder %s15, 1
    %p75 = por %p73, %p74
    %p76 = scmp.ne.s32.totalorder %s67, %s68
    %p77 = scmp.eq.s32.totalorder %s15, 0
    %p78 = por %p76, %p77
    %p79 = scmp.ne.s32.totalorder %s67, %s68
    %p80 = scmp.eq.s32.totalorder %s16, 1
    %p81 = por %p79, %p80
    %p83 = scmp.ne.s32.totalorder %s68, %s82
    %p84 = scmp.eq.s32.totalorder %s16, 0
    %p85 = por %p83, %p84
    %s87 = sadd.s32 %s86, 1
    %p90 = scmp.eq.s32.totalorder %s10, 1
    %p91 = scmp.ne.s32.totalorder %s86, %s88
    %p92 = scmp.eq.s32.totalorder %s10, 0
    %p93 = por %p91, %p92
    %p94 = scmp.ne.s32.totalorder %s86, %s88
    %p95 = scmp.eq.s32.totalorder %s15, 1
    %p96 = por %p94, %p95
    %p97 = scmp.ne.s32.totalorder %s88, %s89
    %p98 = scmp.eq.s32.totalorder %s15, 0
    %p99 = por %p97, %p98
    %p100 = scmp.ne.s32.totalorder %s88, %s89
    %p101 = scmp.eq.s32.totalorder %s16, 1
    %p102 = por %p100, %p101
    %p104 = scmp.ne.s32.totalorder %s89, %s103
    %p105 = scmp.eq.s32.totalorder %s16, 0
    %p106 = por %p104, %p105
    %s107 = ssub.s32 %s10, %s17
    %p108 = scmp.eq.s32.totalorder %s107, 0
    %s110 = sadd.s32 %s109, 1
    %s111 = scalar_select %p108, %s109, %s110
    %p114 = pneg %p108
    %p115 = scmp.eq.s32.totalorder %s10, 1
    %p116 = por %p114, %p115
    %p117 = scmp.ne.s32.totalorder %s109, %s112
    %p118 = scmp.eq.s32.totalorder %s10, 0
    %p119 = por %p117, %p118
    %p120 = scmp.ne.s32.totalorder %s109, %s112
    %p121 = scmp.eq.s32.totalorder %s15, 1
    %p122 = por %p120, %p121
    %p123 = scmp.ne.s32.totalorder %s112, %s113
    %p124 = scmp.eq.s32.totalorder %s15, 0
    %p125 = por %p123, %p124
    %p126 = scmp.ne.s32.totalorder %s112, %s113
    %p127 = scmp.eq.s32.totalorder %s16, 1
    %p128 = por %p126, %p127
    %p130 = scmp.ne.s32.totalorder %s113, %s129
    %p131 = scmp.eq.s32.totalorder %s16, 0
    %p132 = por %p130, %p131
    %p133 = scmp.le.s32.totalorder 1, %s10
    %p134 = scmp.lt.s32.totalorder %s10, 3
    %p135 = pnand %p133, %p134
    %p136 = pneg %p135
    // Predicated region
    $region9: #{cosine_topk_gate.1} parent=5 // pred_check
      _
    $region10: #{cosine_topk_gate.1} parent=5 // pred_check_branch
      %138 = sbr.rel (%p135) target = $region12
    $region11: #{cosine_topk_gate.1} parent=5 // pred_region
      %s139 = ssub.s32 %s10, 1
      // Predicated region
      $region13: #{cosine_topk_gate.1} parent=11 // pred_check
        %p140 = pneg %p57
      $region14: #{cosine_topk_gate.1} parent=11 // pred_check_branch
        %142 = sbr.rel (%p140) target = $region16
      $region15: #{cosine_topk_gate.1} parent=11 // pred_region
        _
      $region16: #{cosine_topk_gate.1} parent=11 // pred_fallthru
        _
      // Predicated region
      $region17: #{cosine_topk_gate.1} parent=11 // pred_check
        %p143 = pneg %p78
      $region18: #{cosine_topk_gate.1} parent=11 // pred_check_branch
        %145 = sbr.rel (%p143) target = $region20
      $region19: #{cosine_topk_gate.1} parent=11 // pred_region
        _
      $region20: #{cosine_topk_gate.1} parent=11 // pred_fallthru
        _
      // Predicated region
      $region21: #{cosine_topk_gate.1} parent=11 // pred_check
        %p146 = pneg %p99
      $region22: #{cosine_topk_gate.1} parent=11 // pred_check_branch
        %148 = sbr.rel (%p146) target = $region24
      $region23: #{cosine_topk_gate.1} parent=11 // pred_region
        _
      $region24: #{cosine_topk_gate.1} parent=11 // pred_fallthru
        _
    $region12: #{cosine_topk_gate.1} parent=5 // pred_fallthru
      _
    %p149 = scmp.lt.s32.totalorder %s10, 2
    // Predicated region
    $region25: #{cosine_topk_gate.1} parent=5 // pred_check
      %p150 = pneg %p149
    $region26: #{cosine_topk_gate.1} parent=5 // pred_check_branch
      %152 = sbr.rel (%p150) target = $region28
    $region27: #{cosine_topk_gate.1} parent=5 // pred_region
      // Predicated region
      $region29: #{cosine_topk_gate.1} parent=27 // pred_check
        %p153 = pneg %p30
      $region30: #{cosine_topk_gate.1} parent=27 // pred_check_branch
        %155 = sbr.rel (%p153) target = $region32
      $region31: #{cosine_topk_gate.1} parent=27 // pred_region
        %s156 = smul.u32 16, %s10
        %p157 = scmp.lt.s32.totalorder %s156, 31
        %s158 = scalar_select %p157, %s156, 31
        %s159 = smul.addr %s158, 4
        %s160 = scalar_lea.vmem %s0, %s159
        %s161 = smul.u32 16, %s10
      $region32: #{cosine_topk_gate.1} parent=27 // pred_fallthru
        _
    $region28: #{cosine_topk_gate.1} parent=5 // pred_fallthru
      _
    %p162 = scmp.le.s32.totalorder 1, %s10
    %p163 = scmp.lt.s32.totalorder %s10, 3
    %p164 = pnand %p162, %p163
    %p165 = pneg %p164
    // Predicated region
    $region33: #{cosine_topk_gate.1} parent=5 // pred_check
      _
    $region34: #{cosine_topk_gate.1} parent=5 // pred_check_branch
      %167 = sbr.rel (%p164) target = $region36
    $region35: #{cosine_topk_gate.1} parent=5 // pred_region
      %s168 = ssub.s32 %s10, 1
      %s169 = smul.u32 16, %s15
      %p170 = scmp.lt.s32.totalorder %s169, 31
      %s171 = scalar_select %p170, %s169, 31
      %s172 = smul.addr %s171, 4
      %s173 = scalar_lea.vmem %s0, %s172
      %p174 = pneg %p36
      %p175 = pneg %p33
      %p176 = pneg %p57
      %p177 = pneg %p54
      %p178 = pneg %p78
      %p179 = pneg %p75
      %p180 = pneg %p99
      %p181 = pneg %p96
      %p182 = pneg %p125
      %p183 = pneg %p122
      %s184 = smul.u32 16, %s15
      %p185 = scmp.lt.s32.totalorder %s184, 31
      %s186 = scalar_select %p185, %s184, 31
      %s187 = smul.addr %s186, 8
      %s188 = scalar_lea.vmem %s4, %s187
      %s189 = smul.u32 16, %s15
      %p190 = scmp.lt.s32.totalorder %s189, 31
      %s191 = scalar_select %p190, %s189, 31
      %s192 = smul.addr %s191, 4
      %s193 = scalar_lea.vmem %s0, %s192
      %s194 = smul.u32 16, %s15
      %s195 = smul.u32 16, %s15
      %p196 = scmp.lt.s32.totalorder %s195, 31
      %s197 = scalar_select %p196, %s195, 31
      %s198 = smul.addr %s197, 8
      %s199 = scalar_lea.vmem %s4, %s198
      %s200 = smul.u32 16, %s15
      %v202 = vld [vmem:[%s193] sm:$0xf]
      %v203 = vld [vmem:[%s193 + $0x4] sm:$0xf]
      %v204 = vld [vmem:[%s193 + $0x8] sm:$0xf]
      %v205 = vld [vmem:[%s193 + $0xc] sm:$0xf]
      %v206 = vld [vmem:[%s193 + $0x10] sm:$0xf]
      %v207 = vld [vmem:[%s193 + $0x14] sm:$0xf]
      %v208 = vld [vmem:[%s193 + $0x18] sm:$0xf]
      %v209 = vld [vmem:[%s193 + $0x1c] sm:$0xf]
      %v210 = vld [vmem:[%s193 + $0x20] sm:$0xf]
      %v211 = vld [vmem:[%s193 + $0x24] sm:$0xf]
      %v212 = vld [vmem:[%s193 + $0x28] sm:$0xf]
      %v213 = vld [vmem:[%s193 + $0x2c] sm:$0xf]
      %v214 = vld [vmem:[%s193 + $0x30] sm:$0xf]
      %v215 = vld [vmem:[%s193 + $0x34] sm:$0xf]
      %v216 = vld [vmem:[%s193 + $0x38] sm:$0xf]
      %v217 = vld [vmem:[%s193 + $0x3c] sm:$0xf]
      %v218 = vld [vmem:[%s1] sm:$0xff]
      %v219 = vld [vmem:[%s1 + $0x8] sm:$0xff]
      %v220 = vld [vmem:[%s1 + $0x10] sm:$0xff]
      %v221 = vld [vmem:[%s1 + $0x18] sm:$0xff]
      %v222 = vld [vmem:[%s2] sm:$0x3]
      %v224 = vlaneseq
      %v225 = vshrl.u32 %v224, 7
      %v226 = vsub.s32 0, %v225
      %v227 = vrot.slane %v222, %v226
      %v228 = vlaneseq
      %v229 = vshrl.u32 %v228, 7
      %v230 = vsub.s32 1, %v229
      %v231 = vrot.slane %v222, %v230
      %v250 = vunpack.c.l.b16 %v202
      %v251 = vunpack.c.l.b16 %v203
      %v252 = vunpack.c.l.b16 %v204
      %v253 = vunpack.c.l.b16 %v205
      %v254 = vunpack.c.l.b16 %v206
      %v255 = vunpack.c.l.b16 %v207
      %v256 = vunpack.c.l.b16 %v208
      %v257 = vunpack.c.l.b16 %v209
      %v258 = vunpack.c.l.b16 %v210
      %v259 = vunpack.c.l.b16 %v211
      %v260 = vunpack.c.l.b16 %v212
      %v261 = vunpack.c.l.b16 %v213
      %v262 = vunpack.c.l.b16 %v214
      %v263 = vunpack.c.l.b16 %v215
      %v264 = vunpack.c.l.b16 %v216
      %v265 = vunpack.c.l.b16 %v217
      %v266 = vpack.c.b16 %v251, %v250
      %v267 = vpack.c.b16 %v253, %v252
      %v268 = vpack.c.b16 %v255, %v254
      %v269 = vpack.c.b16 %v257, %v256
      %v270 = vpack.c.b16 %v259, %v258
      %v271 = vpack.c.b16 %v261, %v260
      %v272 = vpack.c.b16 %v263, %v262
      %v273 = vpack.c.b16 %v265, %v264
      %v278 = vunpack.c.l.b16 %v218
      %v279 = vunpack.c.h.b16 %v218
      %v280 = vunpack.c.l.b16 %v219
      %v281 = vunpack.c.h.b16 %v219
      %v282 = vunpack.c.l.b16 %v220
      %v283 = vunpack.c.h.b16 %v220
      %v284 = vunpack.c.l.b16 %v221
      %v285 = vunpack.c.h.b16 %v221
      %v286 = vpack.c.b16 %v280, %v278
      %v287 = vpack.c.b16 %v281, %v279
      %v288 = vpack.c.b16 %v284, %v282
      %v289 = vpack.c.b16 %v285, %v283
      %vm294 = vcmask 261120
      %v296 = vsel %vm294, %v266, 0
      %v299 = vsel %vm294, %v267, 0
      %v302 = vsel %vm294, %v268, 0
      %v305 = vsel %vm294, %v269, 0
      %v308 = vsel %vm294, %v270, 0
      %v311 = vsel %vm294, %v271, 0
      %v314 = vsel %vm294, %v272, 0
      %v317 = vsel %vm294, %v273, 0
      %319 = vmatprep.subr.bf16.mxu0 %v287
      %320 = vmatpush1.bf16.msra.mxu0 %v286
      %321 = vmatprep.subr.bf16.mxu0 %v289
      %322 = vmatpush1.bf16.msra.mxu0 %v288
      %323 = vmatprep.subr.bf16.mxu0 0
      %324 = vmatpush1.bf16.msra.mxu0 0
      %325 = vmatprep.subr.bf16.mxu0 0
      %326 = vmatpush1.bf16.msra.mxu0 0
      %327 = vmatprep.subr.bf16.mxu0 0
      %328 = vmatpush1.bf16.msra.mxu0 0
      %329 = vmatprep.subr.bf16.mxu0 0
      %330 = vmatpush1.bf16.msra.mxu0 0
      %331 = vmatprep.subr.bf16.mxu0 0
      %332 = vmatpush1.bf16.msra.mxu0 0
      %333 = vmatprep.subr.bf16.mxu0 0
      %334 = vmatpush1.bf16.msra.mxu0 0
      %335 = vmatprep.subr.bf16.mxu0 0
      %336 = vmatpush1.bf16.msra.mxu0 0
      %337 = vmatprep.subr.bf16.mxu0 0
      %338 = vmatpush1.bf16.msra.mxu0 0
      %339 = vmatprep.subr.bf16.mxu0 0
      %340 = vmatpush1.bf16.msra.mxu0 0
      %341 = vmatprep.subr.bf16.mxu0 0
      %342 = vmatpush1.bf16.msra.mxu0 0
      %343 = vmatprep.subr.bf16.mxu0 0
      %344 = vmatpush1.bf16.msra.mxu0 0
      %345 = vmatprep.subr.bf16.mxu0 0
      %346 = vmatpush1.bf16.msra.mxu0 0
      %347 = vmatprep.subr.bf16.mxu0 0
      %348 = vmatpush1.bf16.msra.mxu0 0
      %349 = vmatprep.subr.bf16.mxu0 0
      %350 = vmatpush1.bf16.msra.mxu0 0
      %351 = vmatprep.mubr.bf16.mxu0 0
      %352 = vmatmul.mubr.bf16.gmra.mrb[0].mxu0 %v296
      %v353 = vpop.f32.mrb[0].mxu0
      %v354 = vadd.f32 %v227, %v353
      %v355 = vpop.f32.mrb[0].mxu0
      %v356 = vadd.f32 %v231, %v355
      %v357 = vpop.f32.mrb[0].mxu0
      %v358 = vadd.f32 %v227, %v357
      %v359 = vpop.f32.mrb[0].mxu0
      %v360 = vadd.f32 %v231, %v359
      %361 = vmatprep.mubr.bf16.mxu0 0
      %362 = vmatmul.mubr.bf16.gmra.mrb[0].mxu0 %v299
      %v363 = vpop.f32.mrb[0].mxu0
      %v364 = vadd.f32 %v227, %v363
      %v365 = vpop.f32.mrb[0].mxu0
      %v366 = vadd.f32 %v231, %v365
      %v367 = vpop.f32.mrb[0].mxu0
      %v368 = vadd.f32 %v227, %v367
      %v369 = vpop.f32.mrb[0].mxu0
      %v370 = vadd.f32 %v231, %v369
      %371 = vmatprep.mubr.bf16.mxu0 0
      %372 = vmatmul.mubr.bf16.gmra.mrb[0].mxu0 %v302
      %v373 = vpop.f32.mrb[0].mxu0
      %v374 = vadd.f32 %v227, %v373
      %v375 = vpop.f32.mrb[0].mxu0
      %v376 = vadd.f32 %v231, %v375
      %v377 = vpop.f32.mrb[0].mxu0
      %v378 = vadd.f32 %v227, %v377
      %v379 = vpop.f32.mrb[0].mxu0
      %v380 = vadd.f32 %v231, %v379
      %381 = vmatprep.mubr.bf16.mxu0 0
      %382 = vmatmul.mubr.bf16.gmra.mrb[0].mxu0 %v305
      %v383 = vpop.f32.mrb[0].mxu0
      %v384 = vadd.f32 %v227, %v383
      %v385 = vpop.f32.mrb[0].mxu0
      %v386 = vadd.f32 %v231, %v385
      %v387 = vpop.f32.mrb[0].mxu0
      %v388 = vadd.f32 %v227, %v387
      %v389 = vpop.f32.mrb[0].mxu0
      %v390 = vadd.f32 %v231, %v389
      %391 = vmatprep.mubr.bf16.mxu0 0
      %392 = vmatmul.mubr.bf16.gmra.mrb[0].mxu0 %v308
      %v393 = vpop.f32.mrb[0].mxu0
      %v394 = vadd.f32 %v227, %v393
      %v395 = vpop.f32.mrb[0].mxu0
      %v396 = vadd.f32 %v231, %v395
      %v397 = vpop.f32.mrb[0].mxu0
      %v398 = vadd.f32 %v227, %v397
      %v399 = vpop.f32.mrb[0].mxu0
      %v400 = vadd.f32 %v231, %v399
      %401 = vmatprep.mubr.bf16.mxu0 0
      %402 = vmatmul.mubr.bf16.gmra.mrb[0].mxu0 %v311
      %v403 = vpop.f32.mrb[0].mxu0
      %v404 = vadd.f32 %v227, %v403
      %v405 = vpop.f32.mrb[0].mxu0
      %v406 = vadd.f32 %v231, %v405
      %v407 = vpop.f32.mrb[0].mxu0
      %v408 = vadd.f32 %v227, %v407
      %v409 = vpop.f32.mrb[0].mxu0
      %v410 = vadd.f32 %v231, %v409
      %411 = vmatprep.mubr.bf16.mxu0 0
      %412 = vmatmul.mubr.bf16.gmra.mrb[0].mxu0 %v314
      %v413 = vpop.f32.mrb[0].mxu0
      %v414 = vadd.f32 %v227, %v413
      %v415 = vpop.f32.mrb[0].mxu0
      %v416 = vadd.f32 %v231, %v415
      %v417 = vpop.f32.mrb[0].mxu0
      %v418 = vadd.f32 %v227, %v417
      %v419 = vpop.f32.mrb[0].mxu0
      %v420 = vadd.f32 %v231, %v419
      %421 = vmatprep.mubr.bf16.mxu0 0
      %422 = vmatmul.mubr.bf16.gmra.mrb[0].mxu0 %v317
      %v423 = vpop.f32.mrb[0].mxu0
      %v424 = vadd.f32 %v227, %v423
      %v425 = vpop.f32.mrb[0].mxu0
      %v426 = vadd.f32 %v231, %v425
      %v427 = vpop.f32.mrb[0].mxu0
      %v428 = vadd.f32 %v227, %v427
      %v429 = vpop.f32.mrb[0].mxu0
      %v430 = vadd.f32 %v231, %v429
      %431 = vdwg.mxu0
      %v432 = vld [vmem:[%s3] sm:$0xff]
      %v433 = vld [vmem:[%s3 + $0x8] sm:$0xff]
      %v434 = vld [vmem:[%s3 + $0x10] sm:$0xff]
      %v435 = vld [vmem:[%s3 + $0x18] sm:$0xff]
      %v436 = vld [vmem:[%s3 + $0x20] sm:$0xff]
      %v437 = vld [vmem:[%s3 + $0x28] sm:$0xff]
      %v438 = vld [vmem:[%s3 + $0x30] sm:$0xff]
      %v439 = vld [vmem:[%s3 + $0x38] sm:$0xff]
      %v440 = vld [vmem:[%s3 + $0x40] sm:$0xff]
      %v441 = vld [vmem:[%s3 + $0x48] sm:$0xff]
      %v442 = vld [vmem:[%s3 + $0x50] sm:$0xff]
      %v443 = vld [vmem:[%s3 + $0x58] sm:$0xff]
      %v444 = vld [vmem:[%s3 + $0x60] sm:$0xff]
      %v445 = vld [vmem:[%s3 + $0x68] sm:$0xff]
      %v446 = vld [vmem:[%s3 + $0x70] sm:$0xff]
      %v447 = vld [vmem:[%s3 + $0x78] sm:$0xff]
      %v448 = vld [vmem:[%s3 + $0x80] sm:$0xff]
      %v449 = vld [vmem:[%s3 + $0x88] sm:$0xff]
      %v450 = vld [vmem:[%s3 + $0x90] sm:$0xff]
      %v451 = vld [vmem:[%s3 + $0x98] sm:$0xff]
      %v452 = vld [vmem:[%s3 + $0xa0] sm:$0xff]
      %v453 = vld [vmem:[%s3 + $0xa8] sm:$0xff]
      %v454 = vld [vmem:[%s3 + $0xb0] sm:$0xff]
      %v455 = vld [vmem:[%s3 + $0xb8] sm:$0xff]
      %v456 = vld [vmem:[%s3 + $0xc0] sm:$0xff]
      %v457 = vld [vmem:[%s3 + $0xc8] sm:$0xff]
      %v458 = vld [vmem:[%s3 + $0xd0] sm:$0xff]
      %v459 = vld [vmem:[%s3 + $0xd8] sm:$0xff]
      %v460 = vld [vmem:[%s3 + $0xe0] sm:$0xff]
      %v461 = vld [vmem:[%s3 + $0xe8] sm:$0xff]
      %v462 = vld [vmem:[%s3 + $0xf0] sm:$0xff]
      %v463 = vld [vmem:[%s3 + $0xf8] sm:$0xff]
      %464 = vmatprep.subr.mxu0 0.0
      %465 = vmatpush1.msra.mxu0 %v432
      %466 = vmatprep.subr.mxu0 0.0
      %467 = vmatpush1.msra.mxu0 %v433
      %468 = vmatprep.subr.mxu0 0.0
      %469 = vmatpush1.msra.mxu0 %v434
      %470 = vmatprep.subr.mxu0 0.0
      %471 = vmatpush1.msra.mxu0 %v435
      %472 = vmatprep.subr.mxu0 0.0
      %473 = vmatpush1.msra.mxu0 %v436
      %474 = vmatprep.subr.mxu0 0.0
      %475 = vmatpush1.msra.mxu0 %v437
      %476 = vmatprep.subr.mxu0 0.0
      %477 = vmatpush1.msra.mxu0 %v438
      %478 = vmatprep.subr.mxu0 0.0
      %479 = vmatpush1.msra.mxu0 %v439
      %480 = vmatprep.subr.mxu0 0.0
      %481 = vmatpush1.msra.mxu0 %v440
      %482 = vmatprep.subr.mxu0 0.0
      %483 = vmatpush1.msra.mxu0 %v441
      %484 = vmatprep.subr.mxu0 0.0
      %485 = vmatpush1.msra.mxu0 %v442
      %486 = vmatprep.subr.mxu0 0.0
      %487 = vmatpush1.msra.mxu0 %v443
      %488 = vmatprep.subr.mxu0 0.0
      %489 = vmatpush1.msra.mxu0 %v444
      %490 = vmatprep.subr.mxu0 0.0
      %491 = vmatpush1.msra.mxu0 %v445
      %492 = vmatprep.subr.mxu0 0.0
      %493 = vmatpush1.msra.mxu0 %v446
      %494 = vmatprep.subr.mxu0 0.0
      %495 = vmatpush1.msra.mxu0 %v447
      %496 = vmatprep.subr.mxu0 0.0
      %497 = vmatpush1.msra.mxu0 %v448
      %498 = vmatprep.subr.mxu0 0.0
      %499 = vmatpush1.msra.mxu0 %v449
      %500 = vmatprep.subr.mxu0 0.0
      %501 = vmatpush1.msra.mxu0 %v450
      %502 = vmatprep.subr.mxu0 0.0
      %503 = vmatpush1.msra.mxu0 %v451
      %504 = vmatprep.subr.mxu0 0.0
      %505 = vmatpush1.msra.mxu0 %v452
      %506 = vmatprep.subr.mxu0 0.0
      %507 = vmatpush1.msra.mxu0 %v453
      %508 = vmatprep.subr.mxu0 0.0
      %509 = vmatpush1.msra.mxu0 %v454
      %510 = vmatprep.subr.mxu0 0.0
      %511 = vmatpush1.msra.mxu0 %v455
      %512 = vmatprep.subr.mxu0 0.0
      %513 = vmatpush1.msra.mxu0 %v456
      %514 = vmatprep.subr.mxu0 0.0
      %515 = vmatpush1.msra.mxu0 %v457
      %516 = vmatprep.subr.mxu0 0.0
      %517 = vmatpush1.msra.mxu0 %v458
      %518 = vmatprep.subr.mxu0 0.0
      %519 = vmatpush1.msra.mxu0 %v459
      %520 = vmatprep.subr.mxu0 0.0
      %521 = vmatpush1.msra.mxu0 %v460
      %522 = vmatprep.subr.mxu0 0.0
      %523 = vmatpush1.msra.mxu0 %v461
      %524 = vmatprep.subr.mxu0 0.0
      %525 = vmatpush1.msra.mxu0 %v462
      %526 = vmatprep.subr.mxu0 0.0
      %527 = vmatpush1.msra.mxu0 %v463
      %528 = vmatprep.mubr.f32.mxu0 %v356
      %529 = vmatmul.mubr.f32.gmra.mrb[0].mxu0 %v354
      %v530 = vpop.f32.mrb[0].mxu0
      %v531 = vadd.f32 0.0, %v530
      %v532 = vpop.f32.mrb[0].mxu0
      %533 = vmatprep.mubr.f32.mxu0 %v360
      %534 = vmatmul.mubr.f32.gmra.mrb[0].mxu0 %v358
      %v535 = vpop.f32.mrb[0].mxu0
      %v536 = vadd.f32 0.0, %v535
      %v537 = vpop.f32.mrb[0].mxu0
      %538 = vmatprep.mubr.f32.mxu0 %v366
      %539 = vmatmul.mubr.f32.gmra.mrb[0].mxu0 %v364
      %v540 = vpop.f32.mrb[0].mxu0
      %v541 = vadd.f32 0.0, %v540
      %v542 = vpop.f32.mrb[0].mxu0
      %543 = vmatprep.mubr.f32.mxu0 %v370
      %544 = vmatmul.mubr.f32.gmra.mrb[0].mxu0 %v368
      %v545 = vpop.f32.mrb[0].mxu0
      %v546 = vadd.f32 0.0, %v545
      %v547 = vpop.f32.mrb[0].mxu0
      %548 = vmatprep.mubr.f32.mxu0 %v376
      %549 = vmatmul.mubr.f32.gmra.mrb[0].mxu0 %v374
      %v550 = vpop.f32.mrb[0].mxu0
      %v551 = vadd.f32 0.0, %v550
      %v552 = vpop.f32.mrb[0].mxu0
      %553 = vmatprep.mubr.f32.mxu0 %v380
      %554 = vmatmul.mubr.f32.gmra.mrb[0].mxu0 %v378
      %v555 = vpop.f32.mrb[0].mxu0
      %v556 = vadd.f32 0.0, %v555
      %v557 = vpop.f32.mrb[0].mxu0
      %558 = vmatprep.mubr.f32.mxu0 %v386
      %559 = vmatmul.mubr.f32.gmra.mrb[0].mxu0 %v384
      %v560 = vpop.f32.mrb[0].mxu0
      %v561 = vadd.f32 0.0, %v560
      %v562 = vpop.f32.mrb[0].mxu0
      %563 = vmatprep.mubr.f32.mxu0 %v390
      %564 = vmatmul.mubr.f32.gmra.mrb[0].mxu0 %v388
      %v565 = vpop.f32.mrb[0].mxu0
      %v566 = vadd.f32 0.0, %v565
      %v567 = vpop.f32.mrb[0].mxu0
      %568 = vmatprep.mubr.f32.mxu0 %v396
      %569 = vmatmul.mubr.f32.gmra.mrb[0].mxu0 %v394
      %v570 = vpop.f32.mrb[0].mxu0
      %v571 = vadd.f32 0.0, %v570
      %v572 = vpop.f32.mrb[0].mxu0
      %573 = vmatprep.mubr.f32.mxu0 %v400
      %574 = vmatmul.mubr.f32.gmra.mrb[0].mxu0 %v398
      %v575 = vpop.f32.mrb[0].mxu0
      %v576 = vadd.f32 0.0, %v575
      %v577 = vpop.f32.mrb[0].mxu0
      %578 = vmatprep.mubr.f32.mxu0 %v406
      %579 = vmatmul.mubr.f32.gmra.mrb[0].mxu0 %v404
      %v580 = vpop.f32.mrb[0].mxu0
      %v581 = vadd.f32 0.0, %v580
      %v582 = vpop.f32.mrb[0].mxu0
      %583 = vmatprep.mubr.f32.mxu0 %v410
      %584 = vmatmul.mubr.f32.gmra.mrb[0].mxu0 %v408
      %v585 = vpop.f32.mrb[0].mxu0
      %v586 = vadd.f32 0.0, %v585
      %v587 = vpop.f32.mrb[0].mxu0
      %588 = vmatprep.mubr.f32.mxu0 %v416
      %589 = vmatmul.mubr.f32.gmra.mrb[0].mxu0 %v414
      %v590 = vpop.f32.mrb[0].mxu0
      %v591 = vadd.f32 0.0, %v590
      %v592 = vpop.f32.mrb[0].mxu0
      %593 = vmatprep.mubr.f32.mxu0 %v420
      %594 = vmatmul.mubr.f32.gmra.mrb[0].mxu0 %v418
      %v595 = vpop.f32.mrb[0].mxu0
      %v596 = vadd.f32 0.0, %v595
      %v597 = vpop.f32.mrb[0].mxu0
      %598 = vmatprep.mubr.f32.mxu0 %v426
      %599 = vmatmul.mubr.f32.gmra.mrb[0].mxu0 %v424
      %v600 = vpop.f32.mrb[0].mxu0
      %v601 = vadd.f32 0.0, %v600
      %v602 = vpop.f32.mrb[0].mxu0
      %603 = vmatprep.mubr.f32.mxu0 %v430
      %604 = vmatmul.mubr.f32.gmra.mrb[0].mxu0 %v428
      %v605 = vpop.f32.mrb[0].mxu0
      %v606 = vadd.f32 0.0, %v605
      %v607 = vpop.f32.mrb[0].mxu0
      %608 = vdwg.mxu0
      %v609 = vmul.f32 %v354, %v354
      %v610 = vmul.f32 %v356, %v356
      %v611 = vmul.f32 %v358, %v358
      %v612 = vmul.f32 %v360, %v360
      %v613 = vmul.f32 %v364, %v364
      %v614 = vmul.f32 %v366, %v366
      %v615 = vmul.f32 %v368, %v368
      %v616 = vmul.f32 %v370, %v370
      %v617 = vmul.f32 %v374, %v374
      %v618 = vmul.f32 %v376, %v376
      %v619 = vmul.f32 %v378, %v378
      %v620 = vmul.f32 %v380, %v380
      %v621 = vmul.f32 %v384, %v384
      %v622 = vmul.f32 %v386, %v386
      %v623 = vmul.f32 %v388, %v388
      %v624 = vmul.f32 %v390, %v390
      %v625 = vmul.f32 %v394, %v394
      %v626 = vmul.f32 %v396, %v396
      %v627 = vmul.f32 %v398, %v398
      %v628 = vmul.f32 %v400, %v400
      %v629 = vmul.f32 %v404, %v404
      %v630 = vmul.f32 %v406, %v406
      %v631 = vmul.f32 %v408, %v408
      %v632 = vmul.f32 %v410, %v410
      %v633 = vmul.f32 %v414, %v414
      %v634 = vmul.f32 %v416, %v416
      %v635 = vmul.f32 %v418, %v418
      %v636 = vmul.f32 %v420, %v420
      %v637 = vmul.f32 %v424, %v424
      %v638 = vmul.f32 %v426, %v426
      %v639 = vmul.f32 %v428, %v428
      %v640 = vmul.f32 %v430, %v430
      %v641 = vadd.f32 %v609, %v610
      %642 = vadd.xlane.f32.xlu0 %v641
      %v643 = vpop.xlane.xlu0 %642
      %v644 = vadd.f32 %v611, %v612
      %645 = vadd.xlane.f32.xlu0 %v644
      %v646 = vpop.xlane.xlu0 %645
      %v647 = vadd.f32 %v613, %v614
      %648 = vadd.xlane.f32.xlu0 %v647
      %v649 = vpop.xlane.xlu0 %648
      %v650 = vadd.f32 %v615, %v616
      %651 = vadd.xlane.f32.xlu0 %v650
      %v652 = vpop.xlane.xlu0 %651
      %v653 = vadd.f32 %v617, %v618
      %654 = vadd.xlane.f32.xlu0 %v653
      %v655 = vpop.xlane.xlu0 %654
      %v656 = vadd.f32 %v619, %v620
      %657 = vadd.xlane.f32.xlu0 %v656
      %v658 = vpop.xlane.xlu0 %657
      %v659 = vadd.f32 %v621, %v622
      %660 = vadd.xlane.f32.xlu0 %v659
      %v661 = vpop.xlane.xlu0 %660
      %v662 = vadd.f32 %v623, %v624
      %663 = vadd.xlane.f32.xlu0 %v662
      %v664 = vpop.xlane.xlu0 %663
      %v665 = vadd.f32 %v625, %v626
      %666 = vadd.xlane.f32.xlu0 %v665
      %v667 = vpop.xlane.xlu0 %666
      %v668 = vadd.f32 %v627, %v628
      %669 = vadd.xlane.f32.xlu0 %v668
      %v670 = vpop.xlane.xlu0 %669
      %v671 = vadd.f32 %v629, %v630
      %672 = vadd.xlane.f32.xlu0 %v671
      %v673 = vpop.xlane.xlu0 %672
      %v674 = vadd.f32 %v631, %v632
      %675 = vadd.xlane.f32.xlu0 %v674
      %v676 = vpop.xlane.xlu0 %675
      %v677 = vadd.f32 %v633, %v634
      %678 = vadd.xlane.f32.xlu0 %v677
      %v679 = vpop.xlane.xlu0 %678
      %v680 = vadd.f32 %v635, %v636
      %681 = vadd.xlane.f32.xlu0 %v680
      %v682 = vpop.xlane.xlu0 %681
      %v683 = vadd.f32 %v637, %v638
      %684 = vadd.xlane.f32.xlu0 %v683
      %v685 = vpop.xlane.xlu0 %684
      %v686 = vadd.f32 %v639, %v640
      %687 = vadd.xlane.f32.xlu0 %v686
      %v688 = vpop.xlane.xlu0 %687
      %v689 = vmax.f32 %v643, 1e-24
      %v690 = vmax.f32 %v646, 1e-24
      %v691 = vmax.f32 %v649, 1e-24
      %v692 = vmax.f32 %v652, 1e-24
      %v693 = vmax.f32 %v655, 1e-24
      %v694 = vmax.f32 %v658, 1e-24
      %v695 = vmax.f32 %v661, 1e-24
      %v696 = vmax.f32 %v664, 1e-24
      %v697 = vmax.f32 %v667, 1e-24
      %v698 = vmax.f32 %v670, 1e-24
      %v699 = vmax.f32 %v673, 1e-24
      %v700 = vmax.f32 %v676, 1e-24
      %v701 = vmax.f32 %v679, 1e-24
      %v702 = vmax.f32 %v682, 1e-24
      %v703 = vmax.f32 %v685, 1e-24
      %v704 = vmax.f32 %v688, 1e-24
      %v705 = vrsqrt.pop %v689
      %v706 = vrsqrt.pop %v690
      %v707 = vrsqrt.pop %v691
      %v708 = vrsqrt.pop %v692
      %v709 = vrsqrt.pop %v693
      %v710 = vrsqrt.pop %v694
      %v711 = vrsqrt.pop %v695
      %v712 = vrsqrt.pop %v696
      %v713 = vrsqrt.pop %v697
      %v714 = vrsqrt.pop %v698
      %v715 = vrsqrt.pop %v699
      %v716 = vrsqrt.pop %v700
      %v717 = vrsqrt.pop %v701
      %v718 = vrsqrt.pop %v702
      %v719 = vrsqrt.pop %v703
      %v720 = vrsqrt.pop %v704
      %v721 = vmul.f32 %v531, %v705
      %v722 = vmul.f32 %v536, %v706
      %v723 = vmul.f32 %v541, %v707
      %v724 = vmul.f32 %v546, %v708
      %v725 = vmul.f32 %v551, %v709
      %v726 = vmul.f32 %v556, %v710
      %v727 = vmul.f32 %v561, %v711
      %v728 = vmul.f32 %v566, %v712
      %v729 = vmul.f32 %v571, %v713
      %v730 = vmul.f32 %v576, %v714
      %v731 = vmul.f32 %v581, %v715
      %v732 = vmul.f32 %v586, %v716
      %v733 = vmul.f32 %v591, %v717
      %v734 = vmul.f32 %v596, %v718
      %v735 = vmul.f32 %v601, %v719
      %v736 = vmul.f32 %v606, %v720
      %737 = vst [vmem:[%s199] sm:$0xff] %v721
      %738 = vst [vmem:[%s199 + $0x8] sm:$0xff] %v722
      %739 = vst [vmem:[%s199 + $0x10] sm:$0xff] %v723
      %740 = vst [vmem:[%s199 + $0x18] sm:$0xff] %v724
      %741 = vst [vmem:[%s199 + $0x20] sm:$0xff] %v725
      %742 = vst [vmem:[%s199 + $0x28] sm:$0xff] %v726
      %743 = vst [vmem:[%s199 + $0x30] sm:$0xff] %v727
      %744 = vst [vmem:[%s199 + $0x38] sm:$0xff] %v728
      %745 = vst [vmem:[%s199 + $0x40] sm:$0xff] %v729
      %746 = vst [vmem:[%s199 + $0x48] sm:$0xff] %v730
      %747 = vst [vmem:[%s199 + $0x50] sm:$0xff] %v731
      %748 = vst [vmem:[%s199 + $0x58] sm:$0xff] %v732
      %749 = vst [vmem:[%s199 + $0x60] sm:$0xff] %v733
      %750 = vst [vmem:[%s199 + $0x68] sm:$0xff] %v734
      %751 = vst [vmem:[%s199 + $0x70] sm:$0xff] %v735
      %752 = vst [vmem:[%s199 + $0x78] sm:$0xff] %v736
      %s753 = smul.u32 16, %s15
      %p754 = scmp.lt.s32.totalorder %s753, 31
      %s755 = scalar_select %p754, %s753, 31
      %s756 = smul.addr %s755, 8
      %s757 = scalar_lea.vmem %s4, %s756
      // Predicated region
      $region37: #{cosine_topk_gate.1} parent=35 // pred_check
        %p758 = pneg %p122
      $region38: #{cosine_topk_gate.1} parent=35 // pred_check_branch
        %760 = sbr.rel (%p758) target = $region40
      $region39: #{cosine_topk_gate.1} parent=35 // pred_region
        %s761 = smul.u32 16, %s15
      $region40: #{cosine_topk_gate.1} parent=35 // pred_fallthru
        _
    $region36: #{cosine_topk_gate.1} parent=5 // pred_fallthru
      _
    %p762 = scmp.le.s32.totalorder 2, %s10
    // Predicated region
    $region41: #{cosine_topk_gate.1} parent=5 // pred_check
      %p763 = pneg %p762
    $region42: #{cosine_topk_gate.1} parent=5 // pred_check_branch
      %765 = sbr.rel (%p763) target = $region44
    $region43: #{cosine_topk_gate.1} parent=5 // pred_region
      %s766 = ssub.s32 %s10, 2
      // Predicated region
      $region45: #{cosine_topk_gate.1} parent=43 // pred_check
        %p767 = pneg %p128
      $region46: #{cosine_topk_gate.1} parent=43 // pred_check_branch
        %769 = sbr.rel (%p767) target = $region48
      $region47: #{cosine_topk_gate.1} parent=43 // pred_region
        %s770 = smul.u32 16, %s16
        %p771 = scmp.lt.s32.totalorder %s770, 31
        %s772 = scalar_select %p771, %s770, 31
        %s773 = smul.addr %s772, 8
        %s774 = scalar_lea.vmem %s4, %s773
      $region48: #{cosine_topk_gate.1} parent=43 // pred_fallthru
        _
    $region44: #{cosine_topk_gate.1} parent=5 // pred_fallthru
      _
  $region6: #{cosine_topk_gate.1} parent=0 // loop_footer
    %s14 = sadd.s32 1, %s10
  $region7: #{cosine_topk_gate.1} parent=0 // loop_footer_branch
    %9 = sbr.rel target = $region3
  $region8: #{cosine_topk_gate.1} parent=0 // loop_exit
    _

</llo_original>
